<compile_context>
chip_gen: v7x
topology: tpu7x:2x2x1
jax: 0.10.0
libtpu: 0.0.40
codegen_flags: <defaults>
</compile_context>

<pallas_src>
import jax
import jax.numpy as jnp
from jax.experimental import pallas as pl
from jax.experimental.pallas import tpu as pltpu


EPS = 1e-07
LANE = 128
SUBLANE = 8


def attention_pool_kernel(logits_ref, decision_ref, w_ref, b_ref, out_ref):
    Bc, T, Din = logits_ref.shape
    Dout = decision_ref.shape[-1]
    Dp = w_ref.shape[1]

    # Linear transform.  When T is sublane-aligned the (Bc,T,Din)->(Bc*T,Din)
    # collapse is layout-free and the whole chunk is one MXU matmul.
    if T % SUBLANE == 0:
        x = logits_ref[...].reshape(Bc * T, Din)
        s = jnp.dot(x, w_ref[...], preferred_element_type=jnp.float32) + b_ref[...]
        # clamp(-15,15): exp() cannot overflow afterwards, so the usual softmax
        # max-subtraction is unnecessary (softmax is shift-invariant).
        e = jnp.exp(jnp.clip(s, -15.0, 15.0)).reshape(Bc, T, Dp)
    else:
        # Fallback avoids a hidden per-step VMEM relayout copy for general T.
        s = jnp.einsum("btd,de->bte", logits_ref[...], w_ref[...],
                       preferred_element_type=jnp.float32) + b_ref[...]
        e = jnp.exp(jnp.clip(s, -15.0, 15.0))

    # `decision` stays at its natural Dout width in HBM; zero-extend to the
    # lane-padded width only here in VMEM.  Padded columns pool to 0 and are
    # sliced off in the wrapper.
    d = decision_ref[...]                                   # (Bc, T, Dout)
    if Dp != Dout:
        d = jnp.concatenate(
            [d, jnp.zeros((Bc, T, Dp - Dout), d.dtype)], axis=-1)

    # (Optional further micro-opt: lane-concat [d*e, e] and do one T-reduce;
    # XLU is not the binding slot here, so kept as two sums for simplicity.)
    num = jnp.sum(d * e, axis=1)                            # (Bc, Dp)
    den = jnp.sum(e, axis=1)                                # (Bc, Dp)

    # Fused pooling: with w = e / sum(e),
    #   sum(d*w) / (sum(w) + eps) == sum(d*e) / (sum(e) * (1 + eps)).
    out_ref[...] = (num / (den * (1.0 + EPS))).astype(out_ref.dtype)


def _pad_last(x, to):
    pad = to - x.shape[-1]
    if pad == 0:
        return x
    return jnp.pad(x, [(0, 0)] * (x.ndim - 1) + [(0, pad)])


def attention_pool(logits, decision, weight, bias, *, batch_chunk=256, min_grid=2):
    """logits: [B,T,Din], decision: [B,T,Dout], weight: [Din,Dout], bias: [Dout]."""
    B, T, Din = logits.shape
    Dout = decision.shape[-1]

    # Lane-dense (multiple of 128) padding only for the tiny params and the
    # output; the big `decision` stream stays un-padded in HBM.
    Dp = pl.cdiv(Dout, LANE) * LANE
    weight_p = _pad_last(weight, Dp)
    bias_p = _pad_last(bias.reshape(1, Dout), Dp)

    # Batch chunk: large enough to amortize the ~0.35 us/step grid overhead,
    # small enough to (a) keep >= min_grid steps so both v7x TensorCores get
    # work and (b) stay a few MB/step in VMEM (re-derive if batch_chunk grows:
    # v7x has 64 MiB physical VMEM vs 128 MiB on v5e/v6e).
    Bc = max(1, min(batch_chunk, pl.cdiv(B, min_grid)))
    if Bc % SUBLANE != 0:
        # 2-D output block: second-to-last dim must be a multiple of 8 or
        # equal the full batch dim.
        Bc = min(B, pl.cdiv(Bc, SUBLANE) * SUBLANE)
    grid = pl.cdiv(B, Bc)
    # No wrapper-side batch padding: Pallas masks the ragged last block's
    # output writes, and each output row depends only on its own batch row.

    out = pl.pallas_call(
        attention_pool_kernel,
        out_shape=jax.ShapeDtypeStruct((B, Dp), jnp.float32),
        grid_spec=pltpu.PrefetchScalarGridSpec(
            num_scalar_prefetch=0,
            grid=(grid,),
            in_specs=[
                pl.BlockSpec((Bc, T, Din), lambda b: (b, 0, 0)),
                pl.BlockSpec((Bc, T, Dout), lambda b: (b, 0, 0)),
                pl.BlockSpec((Din, Dp), lambda b: (0, 0)),
                pl.BlockSpec((1, Dp), lambda b: (0, 0)),
            ],
            out_specs=pl.BlockSpec((Bc, Dp), lambda b: (b, 0)),
        ),
        compiler_params=pltpu.CompilerParams(
            dimension_semantics=("parallel",),
            vmem_limit_bytes=32 * 1024 * 1024,
        ),
    )(logits, decision, weight_p, bias_p)

    return out[:, :Dout]


def attention_pool_ref(logits, decision, weight, bias):
    s = jnp.clip(jnp.einsum("btd,de->bte", logits, weight) + bias, -15.0, 15.0)
    w = jax.nn.softmax(s, axis=1)
    return (decision * w).sum(axis=1) / (w.sum(axis=1) + EPS)


if __name__ == "__main__":
    # Small shapes consistent with the module: inputdim=32, outputdim=10,
    # batch=2, seq(T)=8, pooldim=1.
    B, T, Din, Dout = 2, 8, 32, 10

    key = jax.random.PRNGKey(0)
    k1, k2, k3, k4 = jax.random.split(key, 4)

    logits = jax.random.normal(k1, (B, T, Din), dtype=jnp.float32)
    decision = jax.nn.sigmoid(jax.random.normal(k2, (B, T, Dout), dtype=jnp.float32))

    # Deterministic nn.Linear(inputdim, outputdim) params; stored pre-transposed.
    bound = 1.0 / (Din ** 0.5)
    weight = jax.random.uniform(k3, (Din, Dout), jnp.float32, -bound, bound)
    bias = jax.random.uniform(k4, (Dout,), jnp.float32, -bound, bound)

    out = attention_pool(logits, decision, weight, bias)
    out = jax.block_until_ready(out)

    ref = attention_pool_ref(logits, decision, weight, bias)
    assert out.shape == (B, Dout)
    assert jnp.allclose(out, ref, atol=1e-5, rtol=1e-5), "mismatch vs reference"

    print("KERNEL_OK")
</pallas_src>

<mosaic_0001>
module attributes {stable_mosaic.version = 11 : i64} {
  func.func @attention_pool_kernel(%arg0: i32, %arg1: memref<2x8x32xf32, #tpu.memory_space<vmem>>, %arg2: memref<2x8x10xf32, #tpu.memory_space<vmem>>, %arg3: memref<32x128xf32, #tpu.memory_space<vmem>>, %arg4: memref<1x128xf32, #tpu.memory_space<vmem>>, %arg5: memref<2x128xf32, #tpu.memory_space<vmem>>) attributes {dimension_semantics = [#tpu.dimension_semantics<parallel>], iteration_bounds = array<i64: 1>, scalar_prefetch = 0 : i64, scratch_operands = 0 : i64, tpu.core_type = #tpu.core_type<tc>, window_params = [{transform_indices = @transform_0, window_bounds = array<i64: 2, 8, 32>}, {transform_indices = @transform_1, window_bounds = array<i64: 2, 8, 10>}, {pipeline_mode = #tpu.pipeline_mode<synchronous>, transform_indices = @transform_2, window_bounds = array<i64: 32, 128>}, {pipeline_mode = #tpu.pipeline_mode<synchronous>, transform_indices = @transform_3, window_bounds = array<i64: 1, 128>}, {transform_indices = @transform_4, window_bounds = array<i64: 2, 128>}]} {
    %c0 = arith.constant 0 : index
    %c0_0 = arith.constant 0 : index
    %c0_1 = arith.constant 0 : index
    %0 = vector.load %arg1[%c0, %c0_0, %c0_1] : memref<2x8x32xf32, #tpu.memory_space<vmem>>, vector<2x8x32xf32>
    %1 = vector.shape_cast %0 : vector<2x8x32xf32> to vector<16x32xf32>
    %c0_2 = arith.constant 0 : index
    %c0_3 = arith.constant 0 : index
    %2 = vector.load %arg3[%c0_2, %c0_3] : memref<32x128xf32, #tpu.memory_space<vmem>>, vector<32x128xf32>
    %cst = arith.constant dense<0.000000e+00> : vector<16x128xf32>
    %3 = tpu.matmul %1, %2, %cst {dimension_numbers = #tpu.dot_dimension_numbers<[1], [0], [0], [1], [0, 0, 1, 1], [], []>} : vector<16x32xf32>, vector<32x128xf32>, vector<16x128xf32> -> vector<16x128xf32>
    %c0_4 = arith.constant 0 : index
    %c0_5 = arith.constant 0 : index
    %4 = vector.load %arg4[%c0_4, %c0_5] : memref<1x128xf32, #tpu.memory_space<vmem>>, vector<1x128xf32>
    %5 = vector.broadcast %4 : vector<1x128xf32> to vector<16x128xf32>
    %6 = arith.addf %3, %5 : vector<16x128xf32>
    %cst_6 = arith.constant -1.500000e+01 : f32
    %cst_7 = arith.constant 1.500000e+01 : f32
    %7 = vector.broadcast %cst_6 : f32 to vector<16x128xf32>
    %8 = arith.maximumf %7, %6 : vector<16x128xf32>
    %9 = vector.broadcast %cst_7 : f32 to vector<16x128xf32>
    %10 = arith.minimumf %9, %8 : vector<16x128xf32>
    %11 = math.exp %10 : vector<16x128xf32>
    %12 = vector.shape_cast %11 : vector<16x128xf32> to vector<2x8x128xf32>
    %c0_8 = arith.constant 0 : index
    %c0_9 = arith.constant 0 : index
    %c0_10 = arith.constant 0 : index
    %13 = vector.load %arg2[%c0_8, %c0_9, %c0_10] : memref<2x8x10xf32, #tpu.memory_space<vmem>>, vector<2x8x10xf32>
    %cst_11 = arith.constant 0.000000e+00 : f32
    %14 = vector.broadcast %cst_11 : f32 to vector<2x8x118xf32>
    %15 = tpu.concatenate %13, %14 in 2 : vector<2x8x10xf32>, vector<2x8x118xf32> -> vector<2x8x128xf32>
    %16 = arith.mulf %15, %12 : vector<2x8x128xf32>
    %cst_12 = arith.constant dense<0.000000e+00> : vector<2x128xf32>
    %17 = vector.multi_reduction <add>, %16, %cst_12 [1] : vector<2x8x128xf32> to vector<2x128xf32>
    %cst_13 = arith.constant dense<0.000000e+00> : vector<2x128xf32>
    %18 = vector.multi_reduction <add>, %12, %cst_13 [1] : vector<2x8x128xf32> to vector<2x128xf32>
    %cst_14 = arith.constant 1.00000012 : f32
    %19 = vector.broadcast %cst_14 : f32 to vector<2x128xf32>
    %20 = arith.mulf %18, %19 : vector<2x128xf32>
    %21 = arith.divf %17, %20 : vector<2x128xf32>
    %c0_15 = arith.constant 0 : index
    %c0_16 = arith.constant 0 : index
    %22 = vector.load %arg5[%c0_15, %c0_16] : memref<2x128xf32, #tpu.memory_space<vmem>>, vector<2x128xf32>
    tpu.vector_store %arg5[%c0_15, %c0_16], %21 {strides = array<i32>} : memref<2x128xf32, #tpu.memory_space<vmem>>, vector<2x128xf32>,
    return
  }
  func.func @transform_0(%arg0: i32) -> (i32, i32, i32) {
    %c0_i32 = arith.constant 0 : i32
    %c0_i32_0 = arith.constant 0 : i32
    %c0_i32_1 = arith.constant 0 : i32
    return %arg0, %c0_i32, %c0_i32_0 : i32, i32, i32
  }
  func.func @transform_1(%arg0: i32) -> (i32, i32, i32) {
    %c0_i32 = arith.constant 0 : i32
    %c0_i32_0 = arith.constant 0 : i32
    %c0_i32_1 = arith.constant 0 : i32
    return %arg0, %c0_i32, %c0_i32_0 : i32, i32, i32
  }
  func.func @transform_2(%arg0: i32) -> (i32, i32) {
    %c0_i32 = arith.constant 0 : i32
    %c0_i32_0 = arith.constant 0 : i32
    %c0_i32_1 = arith.constant 0 : i32
    return %c0_i32, %c0_i32_0 : i32, i32
  }
  func.func @transform_3(%arg0: i32) -> (i32, i32) {
    %c0_i32 = arith.constant 0 : i32
    %c0_i32_0 = arith.constant 0 : i32
    %c0_i32_1 = arith.constant 0 : i32
    return %c0_i32, %c0_i32_0 : i32, i32
  }
  func.func @transform_4(%arg0: i32) -> (i32, i32) {
    %c0_i32 = arith.constant 0 : i32
    %c0_i32_0 = arith.constant 0 : i32
    return %arg0, %c0_i32 : i32, i32
  }
}

</mosaic_0001>

<llo_original>
// kernel: tpu_custom_call.1
$region0: #{tpu_custom_call.1}
  #allocation0 [shape = 'u32[]', space=smem, size = 0x4, offset = 0x4, fixed_abs, tag = 'smem constant byte address 0x4 - core index']
  #allocation1 [shape = 'u32[144,128]{1,0:T(1,128)}', space=vmem, size = 0x12000, scoped, tag = 'internal scratch']
  %s0 = inlined_call_operand.hbm [shape: f32[2,8,32], index: 0, kind: input, shape index: {}]
  %s1 = inlined_call_operand.hbm [shape: f32[2,8,10], index: 1, kind: input, shape index: {}]
  %s2 = inlined_call_operand.hbm [shape: f32[32,128], index: 2, kind: input, shape index: {}]
  %s3 = inlined_call_operand.vmem [shape: f32[1,128], index: 3, kind: input, shape index: {}]
  %s4 = inlined_call_operand.hbm [shape: f32[2,128], index: 4, kind: output, shape index: {}]
  %s5 = sld [smem:[#allocation0]]
  $region38: #{tpu_custom_call.1} parent=0
    _
  %s7 = ssub.s32 1, %s5
  %s8 = scalar_select 0, %s7, %s5
  $region1: #{tpu_custom_call.1} parent=0
    #allocation2 [shape = 'u8[8192]{0}', space=vmem, size = 0x2000, scoped, tag = 'input window, operand 0, single buffered']
    #allocation3 [shape = 's32[1]{0}', space=sflag, size = 0x4, scoped, tag = 'scoped memory for tpu_custom_call.1']
    #allocation4 [shape = 's32[1]{0}', space=sflag, size = 0x4, scoped, tag = 'scoped memory for tpu_custom_call.1']
    #allocation5 [shape = 'u8[8192]{0}', space=vmem, size = 0x2000, scoped, tag = 'input window, operand 1, single buffered']
    #allocation6 [shape = 's32[1]{0}', space=sflag, size = 0x4, scoped, tag = 'scoped memory for tpu_custom_call.1']
    #allocation7 [shape = 'u8[16384]{0}', space=vmem, size = 0x4000, scoped, tag = 'input window, operand 2, single buffered']
    #allocation8 [shape = 'u8[1024]{0}', space=vmem, size = 0x400, scoped, tag = 'output window, operand 0, single buffered']
    %9 = vsyncpa [#allocation3], 0
    %10 = vsyncpa [#allocation6], 0
    %11 = vsyncpa [#allocation4], 0
    // Predicated region
    $region2: #{tpu_custom_call.1} parent=1 // pred_check
      _
    $region3: #{tpu_custom_call.1} parent=1 // pred_check_branch
      %13 = sbr.rel (0) target = $region5
    $region4: #{tpu_custom_call.1} parent=1 // pred_region
      %s15 = ssub.s32 256, 256
      %16 = vsyncadd [#allocation3], %s15
      %s17 = sshll.u32 [#allocation2], 4
      %s18 = int_to_ptr.vmem [resolvable:$true] %s17
      %23 = dma.hbm_to_vmem [thread:$0]  %s0, 256, %s18, [#allocation3], 128, 128, 8
    $region5: #{tpu_custom_call.1} parent=1 // pred_fallthru
      _
    // Predicated region
    $region6: #{tpu_custom_call.1} parent=1 // pred_check
      _
    $region7: #{tpu_custom_call.1} parent=1 // pred_check_branch
      %25 = sbr.rel (0) target = $region9
    $region8: #{tpu_custom_call.1} parent=1 // pred_region
      %s27 = ssub.s32 256, 256
      %28 = vsyncadd [#allocation6], %s27
      %s29 = sshll.u32 [#allocation5], 4
      %s30 = int_to_ptr.vmem [resolvable:$true] %s29
      %35 = dma.hbm_to_vmem [thread:$0]  %s1, 256, %s30, [#allocation6], 128, 128, 8
    $region9: #{tpu_custom_call.1} parent=1 // pred_fallthru
      _
    // Predicated region
    $region10: #{tpu_custom_call.1} parent=1 // pred_check
      _
    $region11: #{tpu_custom_call.1} parent=1 // pred_check_branch
      %37 = sbr.rel (0) target = $region13
    $region12: #{tpu_custom_call.1} parent=1 // pred_region
      %s39 = ssub.s32 512, 512
      %40 = vsyncadd [#allocation6], %s39
      %s41 = sshll.u32 [#allocation7], 4
      %s42 = int_to_ptr.vmem [resolvable:$true] %s41
      %47 = dma.hbm_to_vmem [thread:$0]  %s2, 512, %s42, [#allocation6], 128, 128, 8
    $region13: #{tpu_custom_call.1} parent=1 // pred_fallthru
      _
    // Predicated region
    $region14: #{tpu_custom_call.1} parent=1 // pred_check
      _
    $region15: #{tpu_custom_call.1} parent=1 // pred_check_branch
      %49 = sbr.rel (0) target = $region17
    $region16: #{tpu_custom_call.1} parent=1 // pred_region
      _
    $region17: #{tpu_custom_call.1} parent=1 // pred_fallthru
      _
    // Predicated region
    $region18: #{tpu_custom_call.1} parent=1 // pred_check
      _
    $region19: #{tpu_custom_call.1} parent=1 // pred_check_branch
      %51 = sbr.rel (0) target = $region21
    $region20: #{tpu_custom_call.1} parent=1 // pred_region
      %52 = dma.done [#allocation3], 256
    $region21: #{tpu_custom_call.1} parent=1 // pred_fallthru
      _
    // Predicated region
    $region22: #{tpu_custom_call.1} parent=1 // pred_check
      _
    $region23: #{tpu_custom_call.1} parent=1 // pred_check_branch
      %54 = sbr.rel (0) target = $region25
    $region24: #{tpu_custom_call.1} parent=1 // pred_region
      %55 = dma.done [#allocation6], 256
    $region25: #{tpu_custom_call.1} parent=1 // pred_fallthru
      _
    // Predicated region
    $region26: #{tpu_custom_call.1} parent=1 // pred_check
      _
    $region27: #{tpu_custom_call.1} parent=1 // pred_check_branch
      %57 = sbr.rel (0) target = $region29
    $region28: #{tpu_custom_call.1} parent=1 // pred_region
      %58 = dma.done [#allocation6], 512
    $region29: #{tpu_custom_call.1} parent=1 // pred_fallthru
      _
    %v59 = vld [vmem:[#allocation2] sm:$0xff]
    %v60 = vld [vmem:[#allocation2 + $0x8] sm:$0xff]
    %v61 = vld [vmem:[#allocation7] sm:$0xff]
    %v62 = vld [vmem:[#allocation7 + $0x8] sm:$0xff]
    %v63 = vld [vmem:[#allocation7 + $0x10] sm:$0xff]
    %v64 = vld [vmem:[#allocation7 + $0x18] sm:$0xff]
    %v65 = vld [vmem:[%s3] sm:$0x1]
    %v67 = vlaneseq
    %v68 = vshrl.u32 %v67, 7
    %v69 = vsub.s32 0, %v68
    %v70 = vrot.slane %v65, %v69
    %vm72 = vcmask 261120
    %v74 = vsel %vm72, %v59, 0
    %v77 = vsel %vm72, %v60, 0
    %79 = vmatprep.subr.mxu0 0.0
    %80 = vmatpush1.msra.mxu0 %v61
    %81 = vmatprep.subr.mxu0 0.0
    %82 = vmatpush1.msra.mxu0 %v62
    %83 = vmatprep.subr.mxu0 0.0
    %84 = vmatpush1.msra.mxu0 %v63
    %85 = vmatprep.subr.mxu0 0.0
    %86 = vmatpush1.msra.mxu0 %v64
    %87 = vmatprep.subr.mxu0 0.0
    %88 = vmatpush1.msra.mxu0 0.0
    %89 = vmatprep.subr.mxu0 0.0
    %90 = vmatpush1.msra.mxu0 0.0
    %91 = vmatprep.subr.mxu0 0.0
    %92 = vmatpush1.msra.mxu0 0.0
    %93 = vmatprep.subr.mxu0 0.0
    %94 = vmatpush1.msra.mxu0 0.0
    %95 = vmatprep.subr.mxu0 0.0
    %96 = vmatpush1.msra.mxu0 0.0
    %97 = vmatprep.subr.mxu0 0.0
    %98 = vmatpush1.msra.mxu0 0.0
    %99 = vmatprep.subr.mxu0 0.0
    %100 = vmatpush1.msra.mxu0 0.0
    %101 = vmatprep.subr.mxu0 0.0
    %102 = vmatpush1.msra.mxu0 0.0
    %103 = vmatprep.subr.mxu0 0.0
    %104 = vmatpush1.msra.mxu0 0.0
    %105 = vmatprep.subr.mxu0 0.0
    %106 = vmatpush1.msra.mxu0 0.0
    %107 = vmatprep.subr.mxu0 0.0
    %108 = vmatpush1.msra.mxu0 0.0
    %109 = vmatprep.subr.mxu0 0.0
    %110 = vmatpush1.msra.mxu0 0.0
    %111 = vmatprep.subr.mxu0 0.0
    %112 = vmatpush1.msra.mxu0 0.0
    %113 = vmatprep.subr.mxu0 0.0
    %114 = vmatpush1.msra.mxu0 0.0
    %115 = vmatprep.subr.mxu0 0.0
    %116 = vmatpush1.msra.mxu0 0.0
    %117 = vmatprep.subr.mxu0 0.0
    %118 = vmatpush1.msra.mxu0 0.0
    %119 = vmatprep.subr.mxu0 0.0
    %120 = vmatpush1.msra.mxu0 0.0
    %121 = vmatprep.subr.mxu0 0.0
    %122 = vmatpush1.msra.mxu0 0.0
    %123 = vmatprep.subr.mxu0 0.0
    %124 = vmatpush1.msra.mxu0 0.0
    %125 = vmatprep.subr.mxu0 0.0
    %126 = vmatpush1.msra.mxu0 0.0
    %127 = vmatprep.subr.mxu0 0.0
    %128 = vmatpush1.msra.mxu0 0.0
    %129 = vmatprep.subr.mxu0 0.0
    %130 = vmatpush1.msra.mxu0 0.0
    %131 = vmatprep.subr.mxu0 0.0
    %132 = vmatpush1.msra.mxu0 0.0
    %133 = vmatprep.subr.mxu0 0.0
    %134 = vmatpush1.msra.mxu0 0.0
    %135 = vmatprep.subr.mxu0 0.0
    %136 = vmatpush1.msra.mxu0 0.0
    %137 = vmatprep.subr.mxu0 0.0
    %138 = vmatpush1.msra.mxu0 0.0
    %139 = vmatprep.subr.mxu0 0.0
    %140 = vmatpush1.msra.mxu0 0.0
    %141 = vmatprep.subr.mxu0 0.0
    %142 = vmatpush1.msra.mxu0 0.0
    %143 = vmatprep.mubr.f32.mxu0 0.0
    %144 = vmatmul.mubr.f32.gmra.mrb[0].mxu0 %v74
    %v145 = vpop.f32.mrb[0].mxu0
    %v146 = vadd.f32 %v70, %v145
    %v147 = vpop.f32.mrb[0].mxu0
    %148 = vmatprep.mubr.f32.mxu0 0.0
    %149 = vmatmul.mubr.f32.gmra.mrb[0].mxu0 %v77
    %v150 = vpop.f32.mrb[0].mxu0
    %v151 = vadd.f32 %v70, %v150
    %v152 = vpop.f32.mrb[0].mxu0
    %153 = vdwg.mxu0
    %v154 = vmax.f32 %v146, -15.0
    %v155 = vmax.f32 %v151, -15.0
    %v156 = vmin.f32 %v154, 15.0
    %v157 = vmin.f32 %v155, 15.0
    %v158 = vmul.f32 %v156, 1.442695
    %v159 = vpow.pop %v158
    %v160 = vmul.f32 %v157, 1.442695
    %v161 = vpow.pop %v160
    %v162 = vld [vmem:[#allocation5] sm:$0xff]
    %v163 = vld [vmem:[#allocation5 + $0x8] sm:$0xff]
    %vm164 = vcmask 80896
    %v165 = vsel %vm164, %v162, 0.0
    %v166 = vsel %vm164, %v163, 0.0
    %v167 = vmul.f32 %v165, %v159
    %v168 = vmul.f32 %v166, %v161
    %v169 = vrot.slane %v167, 4
    %v170 = vadd.f32 %v167, %v169
    %v171 = vrot.slane %v170, 2
    %v172 = vadd.f32 %v170, %v171
    %v173 = vrot.slane %v172, 1
    %v174 = vadd.f32 %v172, %v173
    %v175 = vrot.slane %v168, 4
    %v176 = vadd.f32 %v168, %v175
    %v177 = vrot.slane %v176, 2
    %v178 = vadd.f32 %v176, %v177
    %v179 = vrot.slane %v178, 1
    %v180 = vadd.f32 %v178, %v179
    %v181 = vrot.slane %v159, 4
    %v182 = vadd.f32 %v159, %v181
    %v183 = vrot.slane %v182, 2
    %v184 = vadd.f32 %v182, %v183
    %v185 = vrot.slane %v184, 1
    %v186 = vadd.f32 %v184, %v185
    %v187 = vrot.slane %v161, 4
    %v188 = vadd.f32 %v161, %v187
    %v189 = vrot.slane %v188, 2
    %v190 = vadd.f32 %v188, %v189
    %v191 = vrot.slane %v190, 1
    %v192 = vadd.f32 %v190, %v191
    %v193 = vmul.f32 %v186, 1.0000001
    %v194 = vmul.f32 %v192, 1.0000001
    %v195 = vrcp.pop %v193
    %v196 = vmul.f32 %v174, %v195
    %v197 = vrcp.pop %v194
    %v198 = vmul.f32 %v180, %v197
    %vm201 = vcmask 1041409
    %v202 = vsel %vm201, %v198, %v196
    %204 = vst [vmem:[#allocation8] sm:$0x3] %v202
    // Predicated region
    $region30: #{tpu_custom_call.1} parent=1 // pred_check
      _
    $region31: #{tpu_custom_call.1} parent=1 // pred_check_branch
      %206 = sbr.rel (0) target = $region33
    $region32: #{tpu_custom_call.1} parent=1 // pred_region
      %s208 = ssub.s32 32, 32
      %209 = vsyncadd [#allocation4], %s208
      %s211 = sshll.u32 [#allocation8], 4
      %s212 = int_to_ptr.vmem [resolvable:$true] %s211
      %214 = dma.vmem_to_hbm [thread:$0]  %s212, 32, %s4, [#allocation4]
    $region33: #{tpu_custom_call.1} parent=1 // pred_fallthru
      _
    // Predicated region
    $region34: #{tpu_custom_call.1} parent=1 // pred_check
      _
    $region35: #{tpu_custom_call.1} parent=1 // pred_check_branch
      %216 = sbr.rel (0) target = $region37
    $region36: #{tpu_custom_call.1} parent=1 // pred_region
      %217 = dma.done [#allocation4], 32
    $region37: #{tpu_custom_call.1} parent=1 // pred_fallthru
      _
    %218 = vsyncpa [#allocation3], 1
    %219 = vsyncpa [#allocation6], 1
    %220 = vsyncpa [#allocation4], 1

</llo_original>
